<compile_context>
chip_gen: v7x
topology: tpu7x:2x2x1
jax: 0.10.0
libtpu: 0.0.40
codegen_flags: <defaults>
</compile_context>

<pallas_src>
import functools

import jax
import jax.numpy as jnp
from jax.experimental import pallas as pl
from jax.experimental.pallas import tpu as pltpu


# ----------------------------------------------------------------------------
# In-kernel math helpers
# ----------------------------------------------------------------------------

def _fmix32(h):
    """Murmur3-style 32-bit finalizer (interpret-mode fallback PRNG), uint32."""
    h = h ^ (h >> 16)
    h = h * jnp.uint32(0x85EBCA6B)
    h = h ^ (h >> 13)
    h = h * jnp.uint32(0xC2B2AE35)
    h = h ^ (h >> 16)
    return h


def _polyval(coeffs, x):
    r = jnp.float32(coeffs[0])
    for c in coeffs[1:]:
        r = r * x + jnp.float32(c)
    return r


# Acklam's rational approximation of the inverse normal CDF.
# Only needs +,*,recip,log,sqrt,where -> Mosaic-safe.
_NDTRI_A = (-3.969683028665376e+01, 2.209460984245205e+02, -2.759285104469687e+02,
            1.383577518672690e+02, -3.066479806614716e+01, 2.506628277459239e+00)
_NDTRI_B = (-5.447609879822406e+01, 1.615858368580409e+02, -1.556989798598866e+02,
            6.680131188771972e+01, -1.328068155288572e+01, 1.0)
_NDTRI_C = (-7.784894002430293e-03, -3.223964580411365e-01, -2.400758277161838e+00,
            -2.549732539343734e+00, 4.374664141464968e+00, 2.938163982698783e+00)
_NDTRI_D = (7.784695709041462e-03, 3.224671290700398e-01, 2.445134137142996e+00,
            3.754408661907416e+00, 1.0)


def _ndtri(p, *, on_tpu):
    """Inverse standard-normal CDF for p in (0, 1), f32."""
    plow = jnp.float32(0.02425)
    one = jnp.float32(1.0)
    half = jnp.float32(0.5)

    def _div(num, den):
        if on_tpu:
            # Approx reciprocal runs on the EUP slot (idle here) instead of the
            # saturated VALU; precision loss is far below dither noise.
            return num * pl.reciprocal(den, approx=True)
        return num / den

    # Central region.
    q = p - half
    r = q * q
    x_central = _div(_polyval(_NDTRI_A, r) * q, _polyval(_NDTRI_B, r))

    # Tails: lower-tail formula on min(p, 1-p), mirrored for the upper tail.
    pt = jnp.minimum(p, one - p)
    qt = jnp.sqrt(jnp.float32(-2.0) * jnp.log(pt))
    x_tail = _div(_polyval(_NDTRI_C, qt), _polyval(_NDTRI_D, qt))
    x_tail = jnp.where(p > half, -x_tail, x_tail)

    in_tail = jnp.logical_or(p < plow, p > one - plow)
    return jnp.where(in_tail, x_tail, x_central)


# ----------------------------------------------------------------------------
# Kernel
# ----------------------------------------------------------------------------

def _dither_kernel(seed_ref, coeff_ref, x_ref, o_ref, *, on_tpu):
    shape = x_ref.shape
    pid = pl.program_id(0)

    if on_tpu:
        # Hardware PRNG, seeded per block -> blocks are statistically
        # independent, so the grid axis is safely "parallel".
        pltpu.prng_seed(seed_ref[0], pid)
        bits = pltpu.bitcast(pltpu.prng_random_bits(shape), jnp.uint32)
        # Mantissa bit-trick: top 23 random bits -> float in [1, 2), shifted to
        # (2^-24, 1 - 2^-24).  No int->float convert on the VALU; log stays
        # finite at both ends.
        mant = (bits >> 9) | jnp.uint32(0x3F800000)
        u = pltpu.bitcast(mant, jnp.float32) - jnp.float32(1.0 - 2.0 ** -24)
    else:
        # Interpret-mode / non-TPU fallback: counter-based hash keyed on the
        # global flat index (tiling-invariant noise).
        tr, lanes = shape
        row = jax.lax.broadcasted_iota(jnp.int32, shape, 0)
        col = jax.lax.broadcasted_iota(jnp.int32, shape, 1)
        ctr = (pid * (tr * lanes) + row * lanes + col).astype(jnp.uint32)
        key = _fmix32(seed_ref[0].astype(jnp.uint32) ^ jnp.uint32(0x9E3779B9))
        bits = _fmix32(ctr * jnp.uint32(0x9E3779B1) + key)
        u = ((bits >> 9).astype(jnp.int32).astype(jnp.float32) + jnp.float32(0.5)) \
            * jnp.float32(1.0 / (1 << 23))

    z = _ndtri(u, on_tpu=on_tpu)  # z ~ N(0, 1)

    x = x_ref[...].astype(jnp.float32)
    coeff = coeff_ref[0].astype(jnp.float32)  # SMEM scalar -> no recompile per coeff
    o_ref[...] = (x + coeff * z).astype(o_ref.dtype)


# ----------------------------------------------------------------------------
# Tiling choice
# ----------------------------------------------------------------------------

_LANE_CANDIDATES = (1024, 512, 256, 128)
_MAX_TILE_ELEMS = 1024 * 1024   # ~4 MiB f32 per block (amortizes grid-step cost)
_SPLIT_ELEMS = 128 * 1024       # above this, force >= 2 blocks (v7x has 2 TCs)
_MIN_TILE_ELEMS = 64 * 1024     # don't shrink blocks below this to dodge padding


def _choose_layout(n):
    """Pick (lanes, padded_rows, tile_rows) for a flat element count n."""
    lanes = 128
    for cand in _LANE_CANDIDATES:
        if n % cand == 0:
            lanes = cand
            break
    rows = -(-n // lanes)
    max_tile_rows = max(8, (_MAX_TILE_ELEMS // lanes) // 8 * 8)

    # Small slab: single full-extent block (full dims waive (8,128) divisibility).
    if n <= _SPLIT_ELEMS and rows <= max_tile_rows:
        return lanes, rows, rows

    # Multi-block: cap the tile so the grid has >= 2 blocks and each block is
    # <= _MAX_TILE_ELEMS elements.
    tile_cap = min(max_tile_rows, max(8, (rows // 2) // 8 * 8))
    min_tile_rows = max(8, min(tile_cap, (_MIN_TILE_ELEMS // lanes) // 8 * 8))

    # Prefer a tile that divides rows exactly -> no jnp.pad / out[:n] round-trip.
    if rows % 8 == 0:
        t = tile_cap
        while t >= min_tile_rows:
            if rows % t == 0:
                return lanes, rows, t
            t -= 8

    # Fallback: minimal padding (rows rounded up to a multiple of the tile).
    num_blocks = max(2, -(-rows * lanes // _MAX_TILE_ELEMS))
    tile_rows = max(8, -(-(-(-rows // num_blocks)) // 8) * 8)
    tile_rows = min(tile_rows, max_tile_rows)
    rows_p = -(-rows // tile_rows) * tile_rows
    return lanes, rows_p, tile_rows


# ----------------------------------------------------------------------------
# Wrapper
# ----------------------------------------------------------------------------

def pallas_dither(sig: jax.Array, coeff: float = 1.0, seed: int = 0) -> jax.Array:
    """sig + coeff * N(0, 1) noise, noise generated inside a Pallas TPU kernel."""
    if coeff < 0:
        raise ValueError(f"Expected coeff to be non-negative; got {coeff}")
    if coeff == 0:
        return sig  # identity — skip the kernel entirely

    orig_shape = sig.shape
    orig_dtype = sig.dtype
    flat = sig.reshape(-1)
    n = flat.shape[0]
    if n == 0:
        return sig

    lanes, rows_p, tile_rows = _choose_layout(n)
    padded = rows_p * lanes
    if padded != n:
        flat = jnp.pad(flat, (0, padded - n))
    x2d = flat.reshape(rows_p, lanes)

    on_tpu = jax.default_backend() == "tpu"
    grid = (rows_p // tile_rows,)

    seed_arr = jnp.array([seed], dtype=jnp.int32)
    coeff_arr = jnp.array([coeff], dtype=jnp.float32)

    out2d = pl.pallas_call(
        functools.partial(_dither_kernel, on_tpu=on_tpu),
        out_shape=jax.ShapeDtypeStruct((rows_p, lanes), orig_dtype),
        grid_spec=pltpu.PrefetchScalarGridSpec(
            num_scalar_prefetch=2,
            grid=grid,
            in_specs=[pl.BlockSpec((tile_rows, lanes), lambda i, *_: (i, 0))],
            out_specs=pl.BlockSpec((tile_rows, lanes), lambda i, *_: (i, 0)),
        ),
        compiler_params=pltpu.CompilerParams(
            # Blocks draw from independently seeded PRNG streams -> independent.
            # TODO(synk): on v7x, pltpu.CORE_PARALLEL may force the cross-core
            # split more aggressively than "parallel"; benchmark before switching.
            dimension_semantics=("parallel",),
            vmem_limit_bytes=32 * 1024 * 1024,
        ),
    )(seed_arr, coeff_arr, x2d)

    out = out2d.reshape(-1)
    if padded != n:
        out = out[:n]
    return out.reshape(orig_shape)


if __name__ == "__main__":
    key = jax.random.PRNGKey(0)
    # Small NCHW-style input, consistent with an arbitrary-signal module.
    x = jax.random.normal(key, (2, 4, 16, 16), dtype=jnp.float32)

    coeff = 0.5
    y = jax.block_until_ready(pallas_dither(x, coeff=coeff, seed=1234))

    assert y.shape == x.shape and y.dtype == x.dtype

    # Sanity: the added noise should have roughly std == coeff, mean == 0.
    noise = y - x
    m = float(jnp.mean(noise))
    s = float(jnp.std(noise))
    assert abs(m) < 0.1, f"noise mean too large: {m}"
    assert abs(s - coeff) < 0.1, f"noise std off: {s} vs {coeff}"
    assert bool(jnp.all(jnp.isfinite(y))), "non-finite output"

    # coeff == 0 must be the identity.
    y0 = jax.block_until_ready(pallas_dither(x, coeff=0.0, seed=7))
    assert bool(jnp.allclose(y0, x)), "coeff=0 should be identity"

    print("KERNEL_OK")
</pallas_src>

<mosaic_0001>
module attributes {stable_mosaic.version = 11 : i64} {
  func.func @_dither_kernel(%arg0: i32, %arg1: memref<1xi32, #tpu.memory_space<smem>>, %arg2: memref<1xf32, #tpu.memory_space<smem>>, %arg3: memref<2x1024xf32, #tpu.memory_space<vmem>>, %arg4: memref<2x1024xf32, #tpu.memory_space<vmem>>) attributes {dimension_semantics = [#tpu.dimension_semantics<parallel>], iteration_bounds = array<i64: 1>, scalar_prefetch = 2 : i64, scratch_operands = 0 : i64, tpu.core_type = #tpu.core_type<tc>, window_params = [{transform_indices = @transform_0, window_bounds = array<i64: 2, 1024>}, {transform_indices = @transform_1, window_bounds = array<i64: 2, 1024>}]} {
    %0 = tpu.iota {dimensions = array<i32: 0>} : vector<2x1024xi32>
    %1 = tpu.iota {dimensions = array<i32: 1>} : vector<2x1024xi32>
    %c2048_i32 = arith.constant 2048 : i32
    %2 = arith.muli %arg0, %c2048_i32 : i32
    %c1024_i32 = arith.constant 1024 : i32
    %3 = vector.broadcast %c1024_i32 : i32 to vector<2x1024xi32>
    %4 = arith.muli %0, %3 : vector<2x1024xi32>
    %5 = vector.broadcast %2 : i32 to vector<2x1024xi32>
    %6 = arith.addi %5, %4 : vector<2x1024xi32>
    %7 = arith.addi %6, %1 : vector<2x1024xi32>
    %c0 = arith.constant 0 : index
    %8 = memref.load %arg1[%c0] : memref<1xi32, #tpu.memory_space<smem>>
    %c-1640531527_i32 = arith.constant -1640531527 : i32
    %9 = arith.xori %8, %c-1640531527_i32 : i32
    %c16_i32 = arith.constant 16 : i32
    %10 = arith.shrui %9, %c16_i32 : i32
    %11 = arith.xori %9, %10 : i32
    %c-2048144789_i32 = arith.constant -2048144789 : i32
    %12 = arith.muli %11, %c-2048144789_i32 : i32
    %c13_i32 = arith.constant 13 : i32
    %13 = arith.shrui %12, %c13_i32 : i32
    %14 = arith.xori %12, %13 : i32
    %c-1028477387_i32 = arith.constant -1028477387 : i32
    %15 = arith.muli %14, %c-1028477387_i32 : i32
    %c16_i32_0 = arith.constant 16 : i32
    %16 = arith.shrui %15, %c16_i32_0 : i32
    %17 = arith.xori %15, %16 : i32
    %c-1640531535_i32 = arith.constant -1640531535 : i32
    %18 = vector.broadcast %c-1640531535_i32 : i32 to vector<2x1024xi32>
    %19 = arith.muli %7, %18 : vector<2x1024xi32>
    %20 = vector.broadcast %17 : i32 to vector<2x1024xi32>
    %21 = arith.addi %19, %20 : vector<2x1024xi32>
    %c16_i32_1 = arith.constant 16 : i32
    %22 = vector.broadcast %c16_i32_1 : i32 to vector<2x1024xi32>
    %23 = arith.shrui %21, %22 : vector<2x1024xi32>
    %24 = arith.xori %21, %23 : vector<2x1024xi32>
    %c-2048144789_i32_2 = arith.constant -2048144789 : i32
    %25 = vector.broadcast %c-2048144789_i32_2 : i32 to vector<2x1024xi32>
    %26 = arith.muli %24, %25 : vector<2x1024xi32>
    %c13_i32_3 = arith.constant 13 : i32
    %27 = vector.broadcast %c13_i32_3 : i32 to vector<2x1024xi32>
    %28 = arith.shrui %26, %27 : vector<2x1024xi32>
    %29 = arith.xori %26, %28 : vector<2x1024xi32>
    %c-1028477387_i32_4 = arith.constant -1028477387 : i32
    %30 = vector.broadcast %c-1028477387_i32_4 : i32 to vector<2x1024xi32>
    %31 = arith.muli %29, %30 : vector<2x1024xi32>
    %c16_i32_5 = arith.constant 16 : i32
    %32 = vector.broadcast %c16_i32_5 : i32 to vector<2x1024xi32>
    %33 = arith.shrui %31, %32 : vector<2x1024xi32>
    %34 = arith.xori %31, %33 : vector<2x1024xi32>
    %c9_i32 = arith.constant 9 : i32
    %35 = vector.broadcast %c9_i32 : i32 to vector<2x1024xi32>
    %36 = arith.shrui %34, %35 : vector<2x1024xi32>
    %37 = arith.sitofp %36 : vector<2x1024xi32> to vector<2x1024xf32>
    %cst = arith.constant 5.000000e-01 : f32
    %38 = vector.broadcast %cst : f32 to vector<2x1024xf32>
    %39 = arith.addf %37, %38 : vector<2x1024xf32>
    %cst_6 = arith.constant 1.1920929E-7 : f32
    %40 = vector.broadcast %cst_6 : f32 to vector<2x1024xf32>
    %41 = arith.mulf %39, %40 : vector<2x1024xf32>
    %cst_7 = arith.constant 5.000000e-01 : f32
    %42 = vector.broadcast %cst_7 : f32 to vector<2x1024xf32>
    %43 = arith.subf %41, %42 : vector<2x1024xf32>
    %44 = arith.mulf %43, %43 : vector<2x1024xf32>
    %cst_8 = arith.constant -39.6968307 : f32
    %45 = vector.broadcast %cst_8 : f32 to vector<2x1024xf32>
    %46 = arith.mulf %45, %44 : vector<2x1024xf32>
    %cst_9 = arith.constant 220.946106 : f32
    %47 = vector.broadcast %cst_9 : f32 to vector<2x1024xf32>
    %48 = arith.addf %46, %47 : vector<2x1024xf32>
    %49 = arith.mulf %48, %44 : vector<2x1024xf32>
    %cst_10 = arith.constant -275.928497 : f32
    %50 = vector.broadcast %cst_10 : f32 to vector<2x1024xf32>
    %51 = arith.addf %49, %50 : vector<2x1024xf32>
    %52 = arith.mulf %51, %44 : vector<2x1024xf32>
    %cst_11 = arith.constant 138.357758 : f32
    %53 = vector.broadcast %cst_11 : f32 to vector<2x1024xf32>
    %54 = arith.addf %52, %53 : vector<2x1024xf32>
    %55 = arith.mulf %54, %44 : vector<2x1024xf32>
    %cst_12 = arith.constant -30.6647987 : f32
    %56 = vector.broadcast %cst_12 : f32 to vector<2x1024xf32>
    %57 = arith.addf %55, %56 : vector<2x1024xf32>
    %58 = arith.mulf %57, %44 : vector<2x1024xf32>
    %cst_13 = arith.constant 2.50662827 : f32
    %59 = vector.broadcast %cst_13 : f32 to vector<2x1024xf32>
    %60 = arith.addf %58, %59 : vector<2x1024xf32>
    %61 = arith.mulf %60, %43 : vector<2x1024xf32>
    %cst_14 = arith.constant -54.4760971 : f32
    %62 = vector.broadcast %cst_14 : f32 to vector<2x1024xf32>
    %63 = arith.mulf %62, %44 : vector<2x1024xf32>
    %cst_15 = arith.constant 161.585831 : f32
    %64 = vector.broadcast %cst_15 : f32 to vector<2x1024xf32>
    %65 = arith.addf %63, %64 : vector<2x1024xf32>
    %66 = arith.mulf %65, %44 : vector<2x1024xf32>
    %cst_16 = arith.constant -155.698975 : f32
    %67 = vector.broadcast %cst_16 : f32 to vector<2x1024xf32>
    %68 = arith.addf %66, %67 : vector<2x1024xf32>
    %69 = arith.mulf %68, %44 : vector<2x1024xf32>
    %cst_17 = arith.constant 66.8013153 : f32
    %70 = vector.broadcast %cst_17 : f32 to vector<2x1024xf32>
    %71 = arith.addf %69, %70 : vector<2x1024xf32>
    %72 = arith.mulf %71, %44 : vector<2x1024xf32>
    %cst_18 = arith.constant -13.2806816 : f32
    %73 = vector.broadcast %cst_18 : f32 to vector<2x1024xf32>
    %74 = arith.addf %72, %73 : vector<2x1024xf32>
    %75 = arith.mulf %74, %44 : vector<2x1024xf32>
    %cst_19 = arith.constant 1.000000e+00 : f32
    %76 = vector.broadcast %cst_19 : f32 to vector<2x1024xf32>
    %77 = arith.addf %75, %76 : vector<2x1024xf32>
    %78 = arith.divf %61, %77 : vector<2x1024xf32>
    %cst_20 = arith.constant 1.000000e+00 : f32
    %79 = vector.broadcast %cst_20 : f32 to vector<2x1024xf32>
    %80 = arith.subf %79, %41 : vector<2x1024xf32>
    %81 = arith.minimumf %41, %80 : vector<2x1024xf32>
    %82 = math.log %81 : vector<2x1024xf32>
    %cst_21 = arith.constant -2.000000e+00 : f32
    %83 = vector.broadcast %cst_21 : f32 to vector<2x1024xf32>
    %84 = arith.mulf %83, %82 : vector<2x1024xf32>
    %85 = math.sqrt %84 : vector<2x1024xf32>
    %cst_22 = arith.constant -0.0077848942 : f32
    %86 = vector.broadcast %cst_22 : f32 to vector<2x1024xf32>
    %87 = arith.mulf %86, %85 : vector<2x1024xf32>
    %cst_23 = arith.constant -0.322396457 : f32
    %88 = vector.broadcast %cst_23 : f32 to vector<2x1024xf32>
    %89 = arith.addf %87, %88 : vector<2x1024xf32>
    %90 = arith.mulf %89, %85 : vector<2x1024xf32>
    %cst_24 = arith.constant -2.40075827 : f32
    %91 = vector.broadcast %cst_24 : f32 to vector<2x1024xf32>
    %92 = arith.addf %90, %91 : vector<2x1024xf32>
    %93 = arith.mulf %92, %85 : vector<2x1024xf32>
    %cst_25 = arith.constant -2.54973245 : f32
    %94 = vector.broadcast %cst_25 : f32 to vector<2x1024xf32>
    %95 = arith.addf %93, %94 : vector<2x1024xf32>
    %96 = arith.mulf %95, %85 : vector<2x1024xf32>
    %cst_26 = arith.constant 4.37466431 : f32
    %97 = vector.broadcast %cst_26 : f32 to vector<2x1024xf32>
    %98 = arith.addf %96, %97 : vector<2x1024xf32>
    %99 = arith.mulf %98, %85 : vector<2x1024xf32>
    %cst_27 = arith.constant 2.938164 : f32
    %100 = vector.broadcast %cst_27 : f32 to vector<2x1024xf32>
    %101 = arith.addf %99, %100 : vector<2x1024xf32>
    %cst_28 = arith.constant 0.00778469583 : f32
    %102 = vector.broadcast %cst_28 : f32 to vector<2x1024xf32>
    %103 = arith.mulf %102, %85 : vector<2x1024xf32>
    %cst_29 = arith.constant 0.322467119 : f32
    %104 = vector.broadcast %cst_29 : f32 to vector<2x1024xf32>
    %105 = arith.addf %103, %104 : vector<2x1024xf32>
    %106 = arith.mulf %105, %85 : vector<2x1024xf32>
    %cst_30 = arith.constant 2.44513416 : f32
    %107 = vector.broadcast %cst_30 : f32 to vector<2x1024xf32>
    %108 = arith.addf %106, %107 : vector<2x1024xf32>
    %109 = arith.mulf %108, %85 : vector<2x1024xf32>
    %cst_31 = arith.constant 3.7544086 : f32
    %110 = vector.broadcast %cst_31 : f32 to vector<2x1024xf32>
    %111 = arith.addf %109, %110 : vector<2x1024xf32>
    %112 = arith.mulf %111, %85 : vector<2x1024xf32>
    %cst_32 = arith.constant 1.000000e+00 : f32
    %113 = vector.broadcast %cst_32 : f32 to vector<2x1024xf32>
    %114 = arith.addf %112, %113 : vector<2x1024xf32>
    %115 = arith.divf %101, %114 : vector<2x1024xf32>
    %cst_33 = arith.constant 5.000000e-01 : f32
    %116 = vector.broadcast %cst_33 : f32 to vector<2x1024xf32>
    %117 = arith.cmpf ogt, %41, %116 : vector<2x1024xf32>
    %cst_34 = arith.constant 0.000000e+00 : f32
    %118 = vector.broadcast %cst_34 : f32 to vector<2x1024xf32>
    %119 = arith.subf %118, %115 : vector<2x1024xf32>
    %120 = arith.select %117, %119, %115 : vector<2x1024xi1>, vector<2x1024xf32>
    %cst_35 = arith.constant 2.425000e-02 : f32
    %121 = vector.broadcast %cst_35 : f32 to vector<2x1024xf32>
    %122 = arith.cmpf olt, %41, %121 : vector<2x1024xf32>
    %cst_36 = arith.constant 1.000000e+00 : f32
    %cst_37 = arith.constant 2.425000e-02 : f32
    %123 = arith.subf %cst_36, %cst_37 : f32
    %124 = vector.broadcast %123 : f32 to vector<2x1024xf32>
    %125 = arith.cmpf ogt, %41, %124 : vector<2x1024xf32>
    %126 = arith.ori %122, %125 : vector<2x1024xi1>
    %127 = arith.select %126, %120, %78 : vector<2x1024xi1>, vector<2x1024xf32>
    %c0_38 = arith.constant 0 : index
    %c0_39 = arith.constant 0 : index
    %128 = vector.load %arg3[%c0_38, %c0_39] : memref<2x1024xf32, #tpu.memory_space<vmem>>, vector<2x1024xf32>
    %c0_40 = arith.constant 0 : index
    %129 = memref.load %arg2[%c0_40] : memref<1xf32, #tpu.memory_space<smem>>
    %130 = vector.broadcast %129 : f32 to vector<2x1024xf32>
    %131 = arith.mulf %130, %127 : vector<2x1024xf32>
    %132 = arith.addf %128, %131 : vector<2x1024xf32>
    %c0_41 = arith.constant 0 : index
    %c0_42 = arith.constant 0 : index
    %133 = vector.load %arg4[%c0_41, %c0_42] : memref<2x1024xf32, #tpu.memory_space<vmem>>, vector<2x1024xf32>
    tpu.vector_store %arg4[%c0_41, %c0_42], %132 {strides = array<i32>} : memref<2x1024xf32, #tpu.memory_space<vmem>>, vector<2x1024xf32>,
    return
  }
  func.func @transform_0(%arg0: i32, %arg1: memref<1xi32, #tpu.memory_space<smem>>, %arg2: memref<1xf32, #tpu.memory_space<smem>>) -> (i32, i32) {
    %c0_i32 = arith.constant 0 : i32
    %c0_i32_0 = arith.constant 0 : i32
    return %arg0, %c0_i32 : i32, i32
  }
  func.func @transform_1(%arg0: i32, %arg1: memref<1xi32, #tpu.memory_space<smem>>, %arg2: memref<1xf32, #tpu.memory_space<smem>>) -> (i32, i32) {
    %c0_i32 = arith.constant 0 : i32
    %c0_i32_0 = arith.constant 0 : i32
    return %arg0, %c0_i32 : i32, i32
  }
}

</mosaic_0001>

<llo_original>
// kernel: tpu_custom_call.1
$region0: #{tpu_custom_call.1}
  #allocation0 [shape = 'u32[]', space=smem, size = 0x4, offset = 0x4, fixed_abs, tag = 'smem constant byte address 0x4 - core index']
  #allocation1 [shape = 'u32[144,128]{1,0:T(1,128)}', space=vmem, size = 0x12000, scoped, tag = 'internal scratch']
  #allocation2 [shape = 's32[1]{0}', space=sflag, size = 0x4, scoped, tag = 'scoped memory for tpu_custom_call.1']
  #allocation3 [shape = 's32[1]{0:T(128)S(6)}', space=smem, size = 0x200, scoped, tag = 'prefetched SMEM operand 0']
  #allocation4 [shape = 'f32[1]{0:T(128)S(6)}', space=smem, size = 0x200, scoped, tag = 'prefetched SMEM operand 1']
  %s0 = inlined_call_operand.<no memory space> [shape: s32[1], index: 0, kind: input, shape index: {}]
  %s1 = inlined_call_operand.<no memory space> [shape: f32[1], index: 1, kind: input, shape index: {}]
  %s2 = inlined_call_operand.hbm [shape: f32[2,1024], index: 2, kind: input, shape index: {}]
  %s3 = inlined_call_operand.hbm [shape: f32[2,1024], index: 3, kind: output, shape index: {}]
  %s4 = sld [smem:[#allocation0]]
  $region18: #{tpu_custom_call.1} parent=0
    _
  %s6 = ssub.s32 1, %s4
  %s7 = scalar_select 0, %s6, %s4
  %8 = sst [smem:[#allocation3]] %s0
  %9 = sst [smem:[#allocation4]] %s1
  $region1: #{tpu_custom_call.1} parent=0
    #allocation5 [shape = 'u8[8192]{0}', space=vmem, size = 0x2000, scoped, tag = 'input window, operand 2, single buffered']
    #allocation6 [shape = 's32[1]{0}', space=sflag, size = 0x4, scoped, tag = 'scoped memory for tpu_custom_call.1']
    #allocation7 [shape = 's32[1]{0}', space=sflag, size = 0x4, scoped, tag = 'scoped memory for tpu_custom_call.1']
    #allocation8 [shape = 'u8[8192]{0}', space=vmem, size = 0x2000, scoped, tag = 'output window, operand 0, single buffered']
    %10 = vsyncpa [#allocation6], 0
    %11 = vsyncpa [#allocation7], 0
    // Predicated region
    $region2: #{tpu_custom_call.1} parent=1 // pred_check
      _
    $region3: #{tpu_custom_call.1} parent=1 // pred_check_branch
      %13 = sbr.rel (0) target = $region5
    $region4: #{tpu_custom_call.1} parent=1 // pred_region
      %s15 = ssub.s32 256, 256
      %16 = vsyncadd [#allocation6], %s15
      %s18 = sshll.u32 [#allocation5], 4
      %s19 = int_to_ptr.vmem [resolvable:$true] %s18
      %21 = dma.hbm_to_vmem [thread:$0]  %s2, 256, %s19, [#allocation6]
    $region5: #{tpu_custom_call.1} parent=1 // pred_fallthru
      _
    // Predicated region
    $region6: #{tpu_custom_call.1} parent=1 // pred_check
      _
    $region7: #{tpu_custom_call.1} parent=1 // pred_check_branch
      %23 = sbr.rel (0) target = $region9
    $region8: #{tpu_custom_call.1} parent=1 // pred_region
      %24 = dma.done [#allocation6], 256
    $region9: #{tpu_custom_call.1} parent=1 // pred_fallthru
      _
    %v25 = vlaneseq
    %v26 = vshrl.u32 %v25, 7
    %v27 = vlaneseq
    %v28 = vand.u32 %v27, 127
    %v29 = vadd.s32 %v28, 128
    %v30 = vadd.s32 %v28, 256
    %v31 = vadd.s32 %v28, 384
    %v32 = vadd.s32 %v28, 512
    %v33 = vadd.s32 %v28, 640
    %v34 = vadd.s32 %v28, 768
    %v35 = vadd.s32 %v28, 896
    %s36 = smul.u32 0, 2048
    %v37 = vmul.u32 %v26, 1024
    %v38 = vstv %s36
    %v39 = vadd.s32 %v38, %v37
    %v40 = vadd.s32 %v39, %v28
    %v41 = vadd.s32 %v39, %v29
    %v42 = vadd.s32 %v39, %v30
    %v43 = vadd.s32 %v39, %v31
    %v44 = vadd.s32 %v39, %v32
    %v45 = vadd.s32 %v39, %v33
    %v46 = vadd.s32 %v39, %v34
    %v47 = vadd.s32 %v39, %v35
    %s48 = sld [smem:[#allocation3]]
    %s49 = sxor.u32 %s48, 2654435769
    %s50 = sshrl.u32 %s49, 16
    %s51 = sxor.u32 %s49, %s50
    %s52 = smul.u32 %s51, 2246822507
    %s53 = sshrl.u32 %s52, 13
    %s54 = sxor.u32 %s52, %s53
    %s55 = smul.u32 %s54, 3266489909
    %s56 = sshrl.u32 %s55, 16
    %s57 = sxor.u32 %s55, %s56
    %v58 = vmul.u32 %v40, 2654435761
    %v59 = vmul.u32 %v41, 2654435761
    %v60 = vmul.u32 %v42, 2654435761
    %v61 = vmul.u32 %v43, 2654435761
    %v62 = vmul.u32 %v44, 2654435761
    %v63 = vmul.u32 %v45, 2654435761
    %v64 = vmul.u32 %v46, 2654435761
    %v65 = vmul.u32 %v47, 2654435761
    %v66 = vstv %s57
    %v67 = vadd.s32 %v58, %v66
    %v68 = vadd.s32 %v59, %v66
    %v69 = vadd.s32 %v60, %v66
    %v70 = vadd.s32 %v61, %v66
    %v71 = vadd.s32 %v62, %v66
    %v72 = vadd.s32 %v63, %v66
    %v73 = vadd.s32 %v64, %v66
    %v74 = vadd.s32 %v65, %v66
    %v75 = vshrl.u32 %v67, 16
    %v76 = vshrl.u32 %v68, 16
    %v77 = vshrl.u32 %v69, 16
    %v78 = vshrl.u32 %v70, 16
    %v79 = vshrl.u32 %v71, 16
    %v80 = vshrl.u32 %v72, 16
    %v81 = vshrl.u32 %v73, 16
    %v82 = vshrl.u32 %v74, 16
    %v83 = vxor.u32 %v67, %v75
    %v84 = vxor.u32 %v68, %v76
    %v85 = vxor.u32 %v69, %v77
    %v86 = vxor.u32 %v70, %v78
    %v87 = vxor.u32 %v71, %v79
    %v88 = vxor.u32 %v72, %v80
    %v89 = vxor.u32 %v73, %v81
    %v90 = vxor.u32 %v74, %v82
    %v91 = vmul.u32 %v83, 2246822507
    %v92 = vmul.u32 %v84, 2246822507
    %v93 = vmul.u32 %v85, 2246822507
    %v94 = vmul.u32 %v86, 2246822507
    %v95 = vmul.u32 %v87, 2246822507
    %v96 = vmul.u32 %v88, 2246822507
    %v97 = vmul.u32 %v89, 2246822507
    %v98 = vmul.u32 %v90, 2246822507
    %v99 = vshrl.u32 %v91, 13
    %v100 = vshrl.u32 %v92, 13
    %v101 = vshrl.u32 %v93, 13
    %v102 = vshrl.u32 %v94, 13
    %v103 = vshrl.u32 %v95, 13
    %v104 = vshrl.u32 %v96, 13
    %v105 = vshrl.u32 %v97, 13
    %v106 = vshrl.u32 %v98, 13
    %v107 = vxor.u32 %v91, %v99
    %v108 = vxor.u32 %v92, %v100
    %v109 = vxor.u32 %v93, %v101
    %v110 = vxor.u32 %v94, %v102
    %v111 = vxor.u32 %v95, %v103
    %v112 = vxor.u32 %v96, %v104
    %v113 = vxor.u32 %v97, %v105
    %v114 = vxor.u32 %v98, %v106
    %v115 = vmul.u32 %v107, 3266489909
    %v116 = vmul.u32 %v108, 3266489909
    %v117 = vmul.u32 %v109, 3266489909
    %v118 = vmul.u32 %v110, 3266489909
    %v119 = vmul.u32 %v111, 3266489909
    %v120 = vmul.u32 %v112, 3266489909
    %v121 = vmul.u32 %v113, 3266489909
    %v122 = vmul.u32 %v114, 3266489909
    %v123 = vshrl.u32 %v115, 16
    %v124 = vshrl.u32 %v116, 16
    %v125 = vshrl.u32 %v117, 16
    %v126 = vshrl.u32 %v118, 16
    %v127 = vshrl.u32 %v119, 16
    %v128 = vshrl.u32 %v120, 16
    %v129 = vshrl.u32 %v121, 16
    %v130 = vshrl.u32 %v122, 16
    %v131 = vxor.u32 %v115, %v123
    %v132 = vxor.u32 %v116, %v124
    %v133 = vxor.u32 %v117, %v125
    %v134 = vxor.u32 %v118, %v126
    %v135 = vxor.u32 %v119, %v127
    %v136 = vxor.u32 %v120, %v128
    %v137 = vxor.u32 %v121, %v129
    %v138 = vxor.u32 %v122, %v130
    %v139 = vshrl.u32 %v131, 9
    %v140 = vshrl.u32 %v132, 9
    %v141 = vshrl.u32 %v133, 9
    %v142 = vshrl.u32 %v134, 9
    %v143 = vshrl.u32 %v135, 9
    %v144 = vshrl.u32 %v136, 9
    %v145 = vshrl.u32 %v137, 9
    %v146 = vshrl.u32 %v138, 9
    %v147 = vcvt.s32.f32 %v139
    %v148 = vcvt.s32.f32 %v140
    %v149 = vcvt.s32.f32 %v141
    %v150 = vcvt.s32.f32 %v142
    %v151 = vcvt.s32.f32 %v143
    %v152 = vcvt.s32.f32 %v144
    %v153 = vcvt.s32.f32 %v145
    %v154 = vcvt.s32.f32 %v146
    %v155 = vadd.f32 %v147, 0.5
    %v156 = vadd.f32 %v148, 0.5
    %v157 = vadd.f32 %v149, 0.5
    %v158 = vadd.f32 %v150, 0.5
    %v159 = vadd.f32 %v151, 0.5
    %v160 = vadd.f32 %v152, 0.5
    %v161 = vadd.f32 %v153, 0.5
    %v162 = vadd.f32 %v154, 0.5
    %v163 = vmul.f32 %v155, 1.1920929e-07
    %v164 = vmul.f32 %v156, 1.1920929e-07
    %v165 = vmul.f32 %v157, 1.1920929e-07
    %v166 = vmul.f32 %v158, 1.1920929e-07
    %v167 = vmul.f32 %v159, 1.1920929e-07
    %v168 = vmul.f32 %v160, 1.1920929e-07
    %v169 = vmul.f32 %v161, 1.1920929e-07
    %v170 = vmul.f32 %v162, 1.1920929e-07
    %v171 = vsub.f32 %v163, 0.5
    %v172 = vsub.f32 %v164, 0.5
    %v173 = vsub.f32 %v165, 0.5
    %v174 = vsub.f32 %v166, 0.5
    %v175 = vsub.f32 %v167, 0.5
    %v176 = vsub.f32 %v168, 0.5
    %v177 = vsub.f32 %v169, 0.5
    %v178 = vsub.f32 %v170, 0.5
    %v179 = vmul.f32 %v171, %v171
    %v180 = vmul.f32 %v172, %v172
    %v181 = vmul.f32 %v173, %v173
    %v182 = vmul.f32 %v174, %v174
    %v183 = vmul.f32 %v175, %v175
    %v184 = vmul.f32 %v176, %v176
    %v185 = vmul.f32 %v177, %v177
    %v186 = vmul.f32 %v178, %v178
    %v187 = vmul.f32 %v179, -39.69683
    %v188 = vmul.f32 %v180, -39.69683
    %v189 = vmul.f32 %v181, -39.69683
    %v190 = vmul.f32 %v182, -39.69683
    %v191 = vmul.f32 %v183, -39.69683
    %v192 = vmul.f32 %v184, -39.69683
    %v193 = vmul.f32 %v185, -39.69683
    %v194 = vmul.f32 %v186, -39.69683
    %v195 = vadd.f32 %v187, 220.9461
    %v196 = vadd.f32 %v188, 220.9461
    %v197 = vadd.f32 %v189, 220.9461
    %v198 = vadd.f32 %v190, 220.9461
    %v199 = vadd.f32 %v191, 220.9461
    %v200 = vadd.f32 %v192, 220.9461
    %v201 = vadd.f32 %v193, 220.9461
    %v202 = vadd.f32 %v194, 220.9461
    %v203 = vmul.f32 %v195, %v179
    %v204 = vmul.f32 %v196, %v180
    %v205 = vmul.f32 %v197, %v181
    %v206 = vmul.f32 %v198, %v182
    %v207 = vmul.f32 %v199, %v183
    %v208 = vmul.f32 %v200, %v184
    %v209 = vmul.f32 %v201, %v185
    %v210 = vmul.f32 %v202, %v186
    %v211 = vadd.f32 %v203, -275.9285
    %v212 = vadd.f32 %v204, -275.9285
    %v213 = vadd.f32 %v205, -275.9285
    %v214 = vadd.f32 %v206, -275.9285
    %v215 = vadd.f32 %v207, -275.9285
    %v216 = vadd.f32 %v208, -275.9285
    %v217 = vadd.f32 %v209, -275.9285
    %v218 = vadd.f32 %v210, -275.9285
    %v219 = vmul.f32 %v211, %v179
    %v220 = vmul.f32 %v212, %v180
    %v221 = vmul.f32 %v213, %v181
    %v222 = vmul.f32 %v214, %v182
    %v223 = vmul.f32 %v215, %v183
    %v224 = vmul.f32 %v216, %v184
    %v225 = vmul.f32 %v217, %v185
    %v226 = vmul.f32 %v218, %v186
    %v227 = vadd.f32 %v219, 138.35776
    %v228 = vadd.f32 %v220, 138.35776
    %v229 = vadd.f32 %v221, 138.35776
    %v230 = vadd.f32 %v222, 138.35776
    %v231 = vadd.f32 %v223, 138.35776
    %v232 = vadd.f32 %v224, 138.35776
    %v233 = vadd.f32 %v225, 138.35776
    %v234 = vadd.f32 %v226, 138.35776
    %v235 = vmul.f32 %v227, %v179
    %v236 = vmul.f32 %v228, %v180
    %v237 = vmul.f32 %v229, %v181
    %v238 = vmul.f32 %v230, %v182
    %v239 = vmul.f32 %v231, %v183
    %v240 = vmul.f32 %v232, %v184
    %v241 = vmul.f32 %v233, %v185
    %v242 = vmul.f32 %v234, %v186
    %v243 = vadd.f32 %v235, -30.664799
    %v244 = vadd.f32 %v236, -30.664799
    %v245 = vadd.f32 %v237, -30.664799
    %v246 = vadd.f32 %v238, -30.664799
    %v247 = vadd.f32 %v239, -30.664799
    %v248 = vadd.f32 %v240, -30.664799
    %v249 = vadd.f32 %v241, -30.664799
    %v250 = vadd.f32 %v242, -30.664799
    %v251 = vmul.f32 %v243, %v179
    %v252 = vmul.f32 %v244, %v180
    %v253 = vmul.f32 %v245, %v181
    %v254 = vmul.f32 %v246, %v182
    %v255 = vmul.f32 %v247, %v183
    %v256 = vmul.f32 %v248, %v184
    %v257 = vmul.f32 %v249, %v185
    %v258 = vmul.f32 %v250, %v186
    %v259 = vadd.f32 %v251, 2.5066283
    %v260 = vadd.f32 %v252, 2.5066283
    %v261 = vadd.f32 %v253, 2.5066283
    %v262 = vadd.f32 %v254, 2.5066283
    %v263 = vadd.f32 %v255, 2.5066283
    %v264 = vadd.f32 %v256, 2.5066283
    %v265 = vadd.f32 %v257, 2.5066283
    %v266 = vadd.f32 %v258, 2.5066283
    %v267 = vmul.f32 %v259, %v171
    %v268 = vmul.f32 %v260, %v172
    %v269 = vmul.f32 %v261, %v173
    %v270 = vmul.f32 %v262, %v174
    %v271 = vmul.f32 %v263, %v175
    %v272 = vmul.f32 %v264, %v176
    %v273 = vmul.f32 %v265, %v177
    %v274 = vmul.f32 %v266, %v178
    %v275 = vmul.f32 %v179, -54.476097
    %v276 = vmul.f32 %v180, -54.476097
    %v277 = vmul.f32 %v181, -54.476097
    %v278 = vmul.f32 %v182, -54.476097
    %v279 = vmul.f32 %v183, -54.476097
    %v280 = vmul.f32 %v184, -54.476097
    %v281 = vmul.f32 %v185, -54.476097
    %v282 = vmul.f32 %v186, -54.476097
    %v283 = vadd.f32 %v275, 161.58583
    %v284 = vadd.f32 %v276, 161.58583
    %v285 = vadd.f32 %v277, 161.58583
    %v286 = vadd.f32 %v278, 161.58583
    %v287 = vadd.f32 %v279, 161.58583
    %v288 = vadd.f32 %v280, 161.58583
    %v289 = vadd.f32 %v281, 161.58583
    %v290 = vadd.f32 %v282, 161.58583
    %v291 = vmul.f32 %v283, %v179
    %v292 = vmul.f32 %v284, %v180
    %v293 = vmul.f32 %v285, %v181
    %v294 = vmul.f32 %v286, %v182
    %v295 = vmul.f32 %v287, %v183
    %v296 = vmul.f32 %v288, %v184
    %v297 = vmul.f32 %v289, %v185
    %v298 = vmul.f32 %v290, %v186
    %v299 = vadd.f32 %v291, -155.69897
    %v300 = vadd.f32 %v292, -155.69897
    %v301 = vadd.f32 %v293, -155.69897
    %v302 = vadd.f32 %v294, -155.69897
    %v303 = vadd.f32 %v295, -155.69897
    %v304 = vadd.f32 %v296, -155.69897
    %v305 = vadd.f32 %v297, -155.69897
    %v306 = vadd.f32 %v298, -155.69897
    %v307 = vmul.f32 %v299, %v179
    %v308 = vmul.f32 %v300, %v180
    %v309 = vmul.f32 %v301, %v181
    %v310 = vmul.f32 %v302, %v182
    %v311 = vmul.f32 %v303, %v183
    %v312 = vmul.f32 %v304, %v184
    %v313 = vmul.f32 %v305, %v185
    %v314 = vmul.f32 %v306, %v186
    %v315 = vadd.f32 %v307, 66.801315
    %v316 = vadd.f32 %v308, 66.801315
    %v317 = vadd.f32 %v309, 66.801315
    %v318 = vadd.f32 %v310, 66.801315
    %v319 = vadd.f32 %v311, 66.801315
    %v320 = vadd.f32 %v312, 66.801315
    %v321 = vadd.f32 %v313, 66.801315
    %v322 = vadd.f32 %v314, 66.801315
    %v323 = vmul.f32 %v315, %v179
    %v324 = vmul.f32 %v316, %v180
    %v325 = vmul.f32 %v317, %v181
    %v326 = vmul.f32 %v318, %v182
    %v327 = vmul.f32 %v319, %v183
    %v328 = vmul.f32 %v320, %v184
    %v329 = vmul.f32 %v321, %v185
    %v330 = vmul.f32 %v322, %v186
    %v331 = vadd.f32 %v323, -13.280682
    %v332 = vadd.f32 %v324, -13.280682
    %v333 = vadd.f32 %v325, -13.280682
    %v334 = vadd.f32 %v326, -13.280682
    %v335 = vadd.f32 %v327, -13.280682
    %v336 = vadd.f32 %v328, -13.280682
    %v337 = vadd.f32 %v329, -13.280682
    %v338 = vadd.f32 %v330, -13.280682
    %v339 = vmul.f32 %v331, %v179
    %v340 = vmul.f32 %v332, %v180
    %v341 = vmul.f32 %v333, %v181
    %v342 = vmul.f32 %v334, %v182
    %v343 = vmul.f32 %v335, %v183
    %v344 = vmul.f32 %v336, %v184
    %v345 = vmul.f32 %v337, %v185
    %v346 = vmul.f32 %v338, %v186
    %v347 = vadd.f32 %v339, 1.0
    %v348 = vadd.f32 %v340, 1.0
    %v349 = vadd.f32 %v341, 1.0
    %v350 = vadd.f32 %v342, 1.0
    %v351 = vadd.f32 %v343, 1.0
    %v352 = vadd.f32 %v344, 1.0
    %v353 = vadd.f32 %v345, 1.0
    %v354 = vadd.f32 %v346, 1.0
    %v355 = vrcp.pop %v347
    %v356 = vmul.f32 %v267, %v355
    %v357 = vrcp.pop %v348
    %v358 = vmul.f32 %v268, %v357
    %v359 = vrcp.pop %v349
    %v360 = vmul.f32 %v269, %v359
    %v361 = vrcp.pop %v350
    %v362 = vmul.f32 %v270, %v361
    %v363 = vrcp.pop %v351
    %v364 = vmul.f32 %v271, %v363
    %v365 = vrcp.pop %v352
    %v366 = vmul.f32 %v272, %v365
    %v367 = vrcp.pop %v353
    %v368 = vmul.f32 %v273, %v367
    %v369 = vrcp.pop %v354
    %v370 = vmul.f32 %v274, %v369
    %v371 = vsub.f32 1.0, %v163
    %v372 = vsub.f32 1.0, %v164
    %v373 = vsub.f32 1.0, %v165
    %v374 = vsub.f32 1.0, %v166
    %v375 = vsub.f32 1.0, %v167
    %v376 = vsub.f32 1.0, %v168
    %v377 = vsub.f32 1.0, %v169
    %v378 = vsub.f32 1.0, %v170
    %v379 = vmin.f32 %v163, %v371
    %v380 = vmin.f32 %v164, %v372
    %v381 = vmin.f32 %v165, %v373
    %v382 = vmin.f32 %v166, %v374
    %v383 = vmin.f32 %v167, %v375
    %v384 = vmin.f32 %v168, %v376
    %v385 = vmin.f32 %v169, %v377
    %v386 = vmin.f32 %v170, %v378
    %v387 = vlog2.pop %v379
    %v388 = vmul.f32 %v387, 0.6931472
    %v389 = vlog2.pop %v380
    %v390 = vmul.f32 %v389, 0.6931472
    %v391 = vlog2.pop %v381
    %v392 = vmul.f32 %v391, 0.6931472
    %v393 = vlog2.pop %v382
    %v394 = vmul.f32 %v393, 0.6931472
    %v395 = vlog2.pop %v383
    %v396 = vmul.f32 %v395, 0.6931472
    %v397 = vlog2.pop %v384
    %v398 = vmul.f32 %v397, 0.6931472
    %v399 = vlog2.pop %v385
    %v400 = vmul.f32 %v399, 0.6931472
    %v401 = vlog2.pop %v386
    %v402 = vmul.f32 %v401, 0.6931472
    %v403 = vmul.f32 %v388, -2.0
    %v404 = vmul.f32 %v390, -2.0
    %v405 = vmul.f32 %v392, -2.0
    %v406 = vmul.f32 %v394, -2.0
    %v407 = vmul.f32 %v396, -2.0
    %v408 = vmul.f32 %v398, -2.0
    %v409 = vmul.f32 %v400, -2.0
    %v410 = vmul.f32 %v402, -2.0
    %v411 = vrsqrt.pop %v403
    %v412 = vmul.f32 %v403, %v411
    %vm413 = vcmp.eq.f32.partialorder %v403, inf
    %v414 = vsel %vm413, %v403, %v412
    %vm415 = vcmp.eq.f32.partialorder %v403, 0.0
    %v416 = vand.u32 %v403, 2147483648
    %v417 = vsel %vm415, %v416, %v414
    %v418 = vrsqrt.pop %v404
    %v419 = vmul.f32 %v404, %v418
    %vm420 = vcmp.eq.f32.partialorder %v404, inf
    %v421 = vsel %vm420, %v404, %v419
    %vm422 = vcmp.eq.f32.partialorder %v404, 0.0
    %v423 = vand.u32 %v404, 2147483648
    %v424 = vsel %vm422, %v423, %v421
    %v425 = vrsqrt.pop %v405
    %v426 = vmul.f32 %v405, %v425
    %vm427 = vcmp.eq.f32.partialorder %v405, inf
    %v428 = vsel %vm427, %v405, %v426
    %vm429 = vcmp.eq.f32.partialorder %v405, 0.0
    %v430 = vand.u32 %v405, 2147483648
    %v431 = vsel %vm429, %v430, %v428
    %v432 = vrsqrt.pop %v406
    %v433 = vmul.f32 %v406, %v432
    %vm434 = vcmp.eq.f32.partialorder %v406, inf
    %v435 = vsel %vm434, %v406, %v433
    %vm436 = vcmp.eq.f32.partialorder %v406, 0.0
    %v437 = vand.u32 %v406, 2147483648
    %v438 = vsel %vm436, %v437, %v435
    %v439 = vrsqrt.pop %v407
    %v440 = vmul.f32 %v407, %v439
    %vm441 = vcmp.eq.f32.partialorder %v407, inf
    %v442 = vsel %vm441, %v407, %v440
    %vm443 = vcmp.eq.f32.partialorder %v407, 0.0
    %v444 = vand.u32 %v407, 2147483648
    %v445 = vsel %vm443, %v444, %v442
    %v446 = vrsqrt.pop %v408
    %v447 = vmul.f32 %v408, %v446
    %vm448 = vcmp.eq.f32.partialorder %v408, inf
    %v449 = vsel %vm448, %v408, %v447
    %vm450 = vcmp.eq.f32.partialorder %v408, 0.0
    %v451 = vand.u32 %v408, 2147483648
    %v452 = vsel %vm450, %v451, %v449
    %v453 = vrsqrt.pop %v409
    %v454 = vmul.f32 %v409, %v453
    %vm455 = vcmp.eq.f32.partialorder %v409, inf
    %v456 = vsel %vm455, %v409, %v454
    %vm457 = vcmp.eq.f32.partialorder %v409, 0.0
    %v458 = vand.u32 %v409, 2147483648
    %v459 = vsel %vm457, %v458, %v456
    %v460 = vrsqrt.pop %v410
    %v461 = vmul.f32 %v410, %v460
    %vm462 = vcmp.eq.f32.partialorder %v410, inf
    %v463 = vsel %vm462, %v410, %v461
    %vm464 = vcmp.eq.f32.partialorder %v410, 0.0
    %v465 = vand.u32 %v410, 2147483648
    %v466 = vsel %vm464, %v465, %v463
    %v467 = vmul.f32 %v417, -0.007784894
    %v468 = vmul.f32 %v424, -0.007784894
    %v469 = vmul.f32 %v431, -0.007784894
    %v470 = vmul.f32 %v438, -0.007784894
    %v471 = vmul.f32 %v445, -0.007784894
    %v472 = vmul.f32 %v452, -0.007784894
    %v473 = vmul.f32 %v459, -0.007784894
    %v474 = vmul.f32 %v466, -0.007784894
    %v475 = vadd.f32 %v467, -0.32239646
    %v476 = vadd.f32 %v468, -0.32239646
    %v477 = vadd.f32 %v469, -0.32239646
    %v478 = vadd.f32 %v470, -0.32239646
    %v479 = vadd.f32 %v471, -0.32239646
    %v480 = vadd.f32 %v472, -0.32239646
    %v481 = vadd.f32 %v473, -0.32239646
    %v482 = vadd.f32 %v474, -0.32239646
    %v483 = vmul.f32 %v475, %v417
    %v484 = vmul.f32 %v476, %v424
    %v485 = vmul.f32 %v477, %v431
    %v486 = vmul.f32 %v478, %v438
    %v487 = vmul.f32 %v479, %v445
    %v488 = vmul.f32 %v480, %v452
    %v489 = vmul.f32 %v481, %v459
    %v490 = vmul.f32 %v482, %v466
    %v491 = vadd.f32 %v483, -2.4007583
    %v492 = vadd.f32 %v484, -2.4007583
    %v493 = vadd.f32 %v485, -2.4007583
    %v494 = vadd.f32 %v486, -2.4007583
    %v495 = vadd.f32 %v487, -2.4007583
    %v496 = vadd.f32 %v488, -2.4007583
    %v497 = vadd.f32 %v489, -2.4007583
    %v498 = vadd.f32 %v490, -2.4007583
    %v499 = vmul.f32 %v491, %v417
    %v500 = vmul.f32 %v492, %v424
    %v501 = vmul.f32 %v493, %v431
    %v502 = vmul.f32 %v494, %v438
    %v503 = vmul.f32 %v495, %v445
    %v504 = vmul.f32 %v496, %v452
    %v505 = vmul.f32 %v497, %v459
    %v506 = vmul.f32 %v498, %v466
    %v507 = vadd.f32 %v499, -2.5497324
    %v508 = vadd.f32 %v500, -2.5497324
    %v509 = vadd.f32 %v501, -2.5497324
    %v510 = vadd.f32 %v502, -2.5497324
    %v511 = vadd.f32 %v503, -2.5497324
    %v512 = vadd.f32 %v504, -2.5497324
    %v513 = vadd.f32 %v505, -2.5497324
    %v514 = vadd.f32 %v506, -2.5497324
    %v515 = vmul.f32 %v507, %v417
    %v516 = vmul.f32 %v508, %v424
    %v517 = vmul.f32 %v509, %v431
    %v518 = vmul.f32 %v510, %v438
    %v519 = vmul.f32 %v511, %v445
    %v520 = vmul.f32 %v512, %v452
    %v521 = vmul.f32 %v513, %v459
    %v522 = vmul.f32 %v514, %v466
    %v523 = vadd.f32 %v515, 4.3746643
    %v524 = vadd.f32 %v516, 4.3746643
    %v525 = vadd.f32 %v517, 4.3746643
    %v526 = vadd.f32 %v518, 4.3746643
    %v527 = vadd.f32 %v519, 4.3746643
    %v528 = vadd.f32 %v520, 4.3746643
    %v529 = vadd.f32 %v521, 4.3746643
    %v530 = vadd.f32 %v522, 4.3746643
    %v531 = vmul.f32 %v523, %v417
    %v532 = vmul.f32 %v524, %v424
    %v533 = vmul.f32 %v525, %v431
    %v534 = vmul.f32 %v526, %v438
    %v535 = vmul.f32 %v527, %v445
    %v536 = vmul.f32 %v528, %v452
    %v537 = vmul.f32 %v529, %v459
    %v538 = vmul.f32 %v530, %v466
    %v539 = vadd.f32 %v531, 2.938164
    %v540 = vadd.f32 %v532, 2.938164
    %v541 = vadd.f32 %v533, 2.938164
    %v542 = vadd.f32 %v534, 2.938164
    %v543 = vadd.f32 %v535, 2.938164
    %v544 = vadd.f32 %v536, 2.938164
    %v545 = vadd.f32 %v537, 2.938164
    %v546 = vadd.f32 %v538, 2.938164
    %v547 = vmul.f32 %v417, 0.007784696
    %v548 = vmul.f32 %v424, 0.007784696
    %v549 = vmul.f32 %v431, 0.007784696
    %v550 = vmul.f32 %v438, 0.007784696
    %v551 = vmul.f32 %v445, 0.007784696
    %v552 = vmul.f32 %v452, 0.007784696
    %v553 = vmul.f32 %v459, 0.007784696
    %v554 = vmul.f32 %v466, 0.007784696
    %v555 = vadd.f32 %v547, 0.32246712
    %v556 = vadd.f32 %v548, 0.32246712
    %v557 = vadd.f32 %v549, 0.32246712
    %v558 = vadd.f32 %v550, 0.32246712
    %v559 = vadd.f32 %v551, 0.32246712
    %v560 = vadd.f32 %v552, 0.32246712
    %v561 = vadd.f32 %v553, 0.32246712
    %v562 = vadd.f32 %v554, 0.32246712
    %v563 = vmul.f32 %v555, %v417
    %v564 = vmul.f32 %v556, %v424
    %v565 = vmul.f32 %v557, %v431
    %v566 = vmul.f32 %v558, %v438
    %v567 = vmul.f32 %v559, %v445
    %v568 = vmul.f32 %v560, %v452
    %v569 = vmul.f32 %v561, %v459
    %v570 = vmul.f32 %v562, %v466
    %v571 = vadd.f32 %v563, 2.4451342
    %v572 = vadd.f32 %v564, 2.4451342
    %v573 = vadd.f32 %v565, 2.4451342
    %v574 = vadd.f32 %v566, 2.4451342
    %v575 = vadd.f32 %v567, 2.4451342
    %v576 = vadd.f32 %v568, 2.4451342
    %v577 = vadd.f32 %v569, 2.4451342
    %v578 = vadd.f32 %v570, 2.4451342
    %v579 = vmul.f32 %v571, %v417
    %v580 = vmul.f32 %v572, %v424
    %v581 = vmul.f32 %v573, %v431
    %v582 = vmul.f32 %v574, %v438
    %v583 = vmul.f32 %v575, %v445
    %v584 = vmul.f32 %v576, %v452
    %v585 = vmul.f32 %v577, %v459
    %v586 = vmul.f32 %v578, %v466
    %v587 = vadd.f32 %v579, 3.7544086
    %v588 = vadd.f32 %v580, 3.7544086
    %v589 = vadd.f32 %v581, 3.7544086
    %v590 = vadd.f32 %v582, 3.7544086
    %v591 = vadd.f32 %v583, 3.7544086
    %v592 = vadd.f32 %v584, 3.7544086
    %v593 = vadd.f32 %v585, 3.7544086
    %v594 = vadd.f32 %v586, 3.7544086
    %v595 = vmul.f32 %v587, %v417
    %v596 = vmul.f32 %v588, %v424
    %v597 = vmul.f32 %v589, %v431
    %v598 = vmul.f32 %v590, %v438
    %v599 = vmul.f32 %v591, %v445
    %v600 = vmul.f32 %v592, %v452
    %v601 = vmul.f32 %v593, %v459
    %v602 = vmul.f32 %v594, %v466
    %v603 = vadd.f32 %v595, 1.0
    %v604 = vadd.f32 %v596, 1.0
    %v605 = vadd.f32 %v597, 1.0
    %v606 = vadd.f32 %v598, 1.0
    %v607 = vadd.f32 %v599, 1.0
    %v608 = vadd.f32 %v600, 1.0
    %v609 = vadd.f32 %v601, 1.0
    %v610 = vadd.f32 %v602, 1.0
    %v611 = vrcp.pop %v603
    %v612 = vmul.f32 %v539, %v611
    %v613 = vrcp.pop %v604
    %v614 = vmul.f32 %v540, %v613
    %v615 = vrcp.pop %v605
    %v616 = vmul.f32 %v541, %v615
    %v617 = vrcp.pop %v606
    %v618 = vmul.f32 %v542, %v617
    %v619 = vrcp.pop %v607
    %v620 = vmul.f32 %v543, %v619
    %v621 = vrcp.pop %v608
    %v622 = vmul.f32 %v544, %v621
    %v623 = vrcp.pop %v609
    %v624 = vmul.f32 %v545, %v623
    %v625 = vrcp.pop %v610
    %v626 = vmul.f32 %v546, %v625
    %vm627 = vcmp.gt.f32.partialorder %v163, 0.5
    %vm628 = vcmp.gt.f32.partialorder %v164, 0.5
    %vm629 = vcmp.gt.f32.partialorder %v165, 0.5
    %vm630 = vcmp.gt.f32.partialorder %v166, 0.5
    %vm631 = vcmp.gt.f32.partialorder %v167, 0.5
    %vm632 = vcmp.gt.f32.partialorder %v168, 0.5
    %vm633 = vcmp.gt.f32.partialorder %v169, 0.5
    %vm634 = vcmp.gt.f32.partialorder %v170, 0.5
    %v635 = vsub.f32 0.0, %v612
    %v636 = vsub.f32 0.0, %v614
    %v637 = vsub.f32 0.0, %v616
    %v638 = vsub.f32 0.0, %v618
    %v639 = vsub.f32 0.0, %v620
    %v640 = vsub.f32 0.0, %v622
    %v641 = vsub.f32 0.0, %v624
    %v642 = vsub.f32 0.0, %v626
    %v643 = vsel %vm627, %v635, %v612
    %v644 = vsel %vm628, %v636, %v614
    %v645 = vsel %vm629, %v637, %v616
    %v646 = vsel %vm630, %v638, %v618
    %v647 = vsel %vm631, %v639, %v620
    %v648 = vsel %vm632, %v640, %v622
    %v649 = vsel %vm633, %v641, %v624
    %v650 = vsel %vm634, %v642, %v626
    %vm651 = vcmp.lt.f32.partialorder %v163, 0.02425
    %vm652 = vcmp.lt.f32.partialorder %v164, 0.02425
    %vm653 = vcmp.lt.f32.partialorder %v165, 0.02425
    %vm654 = vcmp.lt.f32.partialorder %v166, 0.02425
    %vm655 = vcmp.lt.f32.partialorder %v167, 0.02425
    %vm656 = vcmp.lt.f32.partialorder %v168, 0.02425
    %vm657 = vcmp.lt.f32.partialorder %v169, 0.02425
    %vm658 = vcmp.lt.f32.partialorder %v170, 0.02425
    %vm659 = vcmp.gt.f32.partialorder %v163, 0.97574997
    %vm660 = vcmp.gt.f32.partialorder %v164, 0.97574997
    %vm661 = vcmp.gt.f32.partialorder %v165, 0.97574997
    %vm662 = vcmp.gt.f32.partialorder %v166, 0.97574997
    %vm663 = vcmp.gt.f32.partialorder %v167, 0.97574997
    %vm664 = vcmp.gt.f32.partialorder %v168, 0.97574997
    %vm665 = vcmp.gt.f32.partialorder %v169, 0.97574997
    %vm666 = vcmp.gt.f32.partialorder %v170, 0.97574997
    %vm667 = vmor %vm651, %vm659
    %vm668 = vmor %vm652, %vm660
    %vm669 = vmor %vm653, %vm661
    %vm670 = vmor %vm654, %vm662
    %vm671 = vmor %vm655, %vm663
    %vm672 = vmor %vm656, %vm664
    %vm673 = vmor %vm657, %vm665
    %vm674 = vmor %vm658, %vm666
    %v675 = vsel %vm667, %v643, %v356
    %v676 = vsel %vm668, %v644, %v358
    %v677 = vsel %vm669, %v645, %v360
    %v678 = vsel %vm670, %v646, %v362
    %v679 = vsel %vm671, %v647, %v364
    %v680 = vsel %vm672, %v648, %v366
    %v681 = vsel %vm673, %v649, %v368
    %v682 = vsel %vm674, %v650, %v370
    %v683 = vld [vmem:[#allocation5] sm:$0xff]
    %v684 = vld [vmem:[#allocation5 + $0x8] sm:$0xff]
    %s685 = sld [smem:[#allocation4]]
    %v686 = vstv %s685
    %v687 = vmul.f32 %v686, %v675
    %v688 = vmul.f32 %v686, %v676
    %v689 = vmul.f32 %v686, %v677
    %v690 = vmul.f32 %v686, %v678
    %v691 = vmul.f32 %v686, %v679
    %v692 = vmul.f32 %v686, %v680
    %v693 = vmul.f32 %v686, %v681
    %v694 = vmul.f32 %v686, %v682
    %v703 = vcombine.low %v687, %v688
    %v704 = vcombine.low %v689, %v690
    %v706 = vunpack.c.l.s4 1983009808
    %v707 = vunpack.c.0.s8 %v706
    %v708 = vlaneseq
    %v709 = vshrl.u32 %v708, 7
    %v710 = vsub.s32 %v707, %v709
    %v711 = vrot.slane %v703, %v710
    %v713 = vunpack.c.l.s4 1983009808
    %v714 = vunpack.c.0.s8 %v713
    %v715 = vlaneseq
    %v716 = vshrl.u32 %v715, 7
    %v717 = vsub.s32 %v714, %v716
    %v718 = vrot.slane %v704, %v717
    %v719 = vcombine.low %v711, %v718
    %v720 = vcombine.low %v691, %v692
    %v721 = vcombine.low %v693, %v694
    %v723 = vunpack.c.l.s4 1983009808
    %v724 = vunpack.c.0.s8 %v723
    %v725 = vlaneseq
    %v726 = vshrl.u32 %v725, 7
    %v727 = vsub.s32 %v724, %v726
    %v728 = vrot.slane %v720, %v727
    %v730 = vunpack.c.l.s4 1983009808
    %v731 = vunpack.c.0.s8 %v730
    %v732 = vlaneseq
    %v733 = vshrl.u32 %v732, 7
    %v734 = vsub.s32 %v731, %v733
    %v735 = vrot.slane %v721, %v734
    %v736 = vcombine.low %v728, %v735
    %v739 = vadd.f32 %v683, %v719
    %v740 = vadd.f32 %v684, %v736
    %741 = vst [vmem:[#allocation8] sm:$0xff] %v739
    %742 = vst [vmem:[#allocation8 + $0x8] sm:$0xff] %v740
    // Predicated region
    $region10: #{tpu_custom_call.1} parent=1 // pred_check
      _
    $region11: #{tpu_custom_call.1} parent=1 // pred_check_branch
      %744 = sbr.rel (0) target = $region13
    $region12: #{tpu_custom_call.1} parent=1 // pred_region
      %s746 = ssub.s32 256, 256
      %747 = vsyncadd [#allocation7], %s746
      %s749 = sshll.u32 [#allocation8], 4
      %s750 = int_to_ptr.vmem [resolvable:$true] %s749
      %752 = dma.vmem_to_hbm [thread:$0]  %s750, 256, %s3, [#allocation7]
    $region13: #{tpu_custom_call.1} parent=1 // pred_fallthru
      _
    // Predicated region
    $region14: #{tpu_custom_call.1} parent=1 // pred_check
      _
    $region15: #{tpu_custom_call.1} parent=1 // pred_check_branch
      %754 = sbr.rel (0) target = $region17
    $region16: #{tpu_custom_call.1} parent=1 // pred_region
      %755 = dma.done [#allocation7], 256
    $region17: #{tpu_custom_call.1} parent=1 // pred_fallthru
      _
    %756 = vsyncpa [#allocation6], 1
    %757 = vsyncpa [#allocation7], 1

</llo_original>
